<compile_context>
chip_gen: v5e
topology: v5e:2x2
jax: 0.10.0
libtpu: 0.0.40
codegen_flags: <defaults>
</compile_context>

<pallas_src>
import math

import jax
import jax.numpy as jnp
from jax.experimental import pallas as pl
from jax.experimental.pallas import tpu as pltpu


def _feature_transform_kernel(x_ref, w_ref, b_ref, o_ref):
    # One fused multiply-add per vreg on the VPU. Compute in f32 (no-op for
    # f32 inputs; safe for bf16 on v5e which has no bf16 VPU), cast on store.
    x = x_ref[...].astype(jnp.float32)
    w = w_ref[...].astype(jnp.float32)   # (1, L) -> broadcast over rows
    b = b_ref[...].astype(jnp.float32)
    o_ref[...] = (x * w + b).astype(o_ref.dtype)


def _pick_tile_rows(rows, lane_width, itemsize, dtype):
    """Rows per block: sublane-quantum multiple, ~2 MiB blocks, >= 2 grid steps."""
    sub = 16 if jnp.dtype(dtype) == jnp.dtype(jnp.bfloat16) else 8
    if rows <= 2 * sub:
        return rows  # single full block (full-dim exemption from the /8 rule)
    row_bytes = lane_width * itemsize
    target = max(sub, (2 * 1024 * 1024) // max(row_bytes, 1))   # ~2 MiB x-tile
    target = max(sub, (target // sub) * sub)
    half = max(sub, (rows // 2 // sub) * sub)  # guarantee >= 2 steps (v7x: 2 TCs)
    return min(target, half)


# Below this many bytes the pallas_call overhead dominates; let XLA fuse it.
_KERNEL_MIN_BYTES = 256 * 1024
_MAX_FOLD_LANES = 512   # widest lane-dense slab we fold to


def feature_transform(x, w, b, *, force_kernel=False):
    """y[:, i] = w[i] * x[:, i] + b[i].   x: (B, D),  w/b: (D,)."""
    B, D = x.shape
    dtype = x.dtype
    itemsize = jnp.dtype(dtype).itemsize

    w = w.astype(dtype)
    b = b.astype(dtype)

    # Tiny problems: plain XLA is strictly faster than a kernel launch.
    if (not force_kernel) and (B * D * itemsize < _KERNEL_MIN_BYTES):
        return x * w[None, :] + b[None, :]

    # --- layout plumbing: make the lane (last) dim dense (multiple of 128) ---
    rows, lanes = B, D
    x2 = x
    w2 = w.reshape(1, D)
    b2 = b.reshape(1, D)
    unpack = lambda y: y

    if D % 128 != 0 and (B * D) % 128 == 0:
        L = math.lcm(D, 128)
        # Widen the slab (bigger unmasked stores) while it still divides cleanly.
        while L * 2 <= _MAX_FOLD_LANES and (B * D) % (L * 2) == 0:
            L *= 2
        if (B * D) % L == 0:
            fold = L // D
            rows, lanes = (B * D) // L, L
            x2 = x.reshape(rows, lanes)               # contiguous reshape: free
            w2 = jnp.tile(w, fold).reshape(1, lanes)  # lane j holds feature j % D
            b2 = jnp.tile(b, fold).reshape(1, lanes)
            unpack = lambda y: y.reshape(B, D)
    # else: D is a multiple of 128 (already lane-dense) or cannot be folded
    # cleanly -> full-D block (full-dim exemption); lane-sparse only if D < 128.

    tile_rows = _pick_tile_rows(rows, lanes, itemsize, dtype)
    grid = (pl.cdiv(rows, tile_rows),)

    y2 = pl.pallas_call(
        _feature_transform_kernel,
        out_shape=jax.ShapeDtypeStruct((rows, lanes), dtype),
        grid_spec=pltpu.PrefetchScalarGridSpec(
            num_scalar_prefetch=0,
            grid=grid,
            in_specs=[
                pl.BlockSpec((tile_rows, lanes), lambda i: (i, 0)),  # x tile
                pl.BlockSpec((1, lanes), lambda i: (0, 0)),          # w row (resident)
                pl.BlockSpec((1, lanes), lambda i: (0, 0)),          # b row (resident)
            ],
            out_specs=pl.BlockSpec((tile_rows, lanes), lambda i: (i, 0)),
        ),
        compiler_params=pltpu.CompilerParams(
            dimension_semantics=("parallel",),   # batch rows shard across TCs (v7x)
        ),
    )(x2, w2, b2)

    return unpack(y2)


if __name__ == "__main__":
    key = jax.random.PRNGKey(0)
    kx, kw, kb, kx2 = jax.random.split(key, 4)

    # Small shapes consistent with the module: batch=8, feature_dim=32.
    B, D = 8, 32
    x = jax.random.normal(kx, (B, D), dtype=jnp.float32)
    # nn.Linear(1, 1) init: weight/bias ~ U(-1, 1) since fan_in == 1.
    w = jax.random.uniform(kw, (D,), dtype=jnp.float32, minval=-1.0, maxval=1.0)
    b = jax.random.uniform(kb, (D,), dtype=jnp.float32, minval=-1.0, maxval=1.0)

    # Force the Pallas kernel even at this toy size so the kernel path runs.
    y = feature_transform(x, w, b, force_kernel=True)
    y = jax.block_until_ready(y)
    y_ref = x * w[None, :] + b[None, :]
    assert y.shape == (B, D)
    assert jnp.allclose(y, y_ref, atol=1e-6), "mismatch vs reference (small)"

    # A medium case exercising the wide lane-dense repack and a multi-step grid.
    B2 = 2048
    x_big = jax.random.normal(kx2, (B2, D), dtype=jnp.float32)
    y_big = jax.block_until_ready(feature_transform(x_big, w, b, force_kernel=True))
    y_big_ref = x_big * w[None, :] + b[None, :]
    assert y_big.shape == (B2, D)
    assert jnp.allclose(y_big, y_big_ref, atol=1e-6), "mismatch vs reference (medium)"

    print("KERNEL_OK")
</pallas_src>

<mosaic_0001>
module attributes {stable_mosaic.version = 11 : i64} {
  func.func @_feature_transform_kernel(%arg0: i32, %arg1: memref<1x256xf32, #tpu.memory_space<vmem>>, %arg2: memref<1x256xf32, #tpu.memory_space<vmem>>, %arg3: memref<1x256xf32, #tpu.memory_space<vmem>>, %arg4: memref<1x256xf32, #tpu.memory_space<vmem>>) attributes {dimension_semantics = [#tpu.dimension_semantics<parallel>], iteration_bounds = array<i64: 1>, scalar_prefetch = 0 : i64, scratch_operands = 0 : i64, tpu.core_type = #tpu.core_type<tc>, window_params = [{transform_indices = @transform_0, window_bounds = array<i64: 1, 256>}, {pipeline_mode = #tpu.pipeline_mode<synchronous>, transform_indices = @transform_1, window_bounds = array<i64: 1, 256>}, {pipeline_mode = #tpu.pipeline_mode<synchronous>, transform_indices = @transform_2, window_bounds = array<i64: 1, 256>}, {transform_indices = @transform_3, window_bounds = array<i64: 1, 256>}]} {
    %c0 = arith.constant 0 : index
    %c0_0 = arith.constant 0 : index
    %0 = vector.load %arg1[%c0, %c0_0] : memref<1x256xf32, #tpu.memory_space<vmem>>, vector<1x256xf32>
    %c0_1 = arith.constant 0 : index
    %c0_2 = arith.constant 0 : index
    %1 = vector.load %arg2[%c0_1, %c0_2] : memref<1x256xf32, #tpu.memory_space<vmem>>, vector<1x256xf32>
    %c0_3 = arith.constant 0 : index
    %c0_4 = arith.constant 0 : index
    %2 = vector.load %arg3[%c0_3, %c0_4] : memref<1x256xf32, #tpu.memory_space<vmem>>, vector<1x256xf32>
    %3 = arith.mulf %0, %1 : vector<1x256xf32>
    %4 = arith.addf %3, %2 : vector<1x256xf32>
    %c0_5 = arith.constant 0 : index
    %c0_6 = arith.constant 0 : index
    %5 = vector.load %arg4[%c0_5, %c0_6] : memref<1x256xf32, #tpu.memory_space<vmem>>, vector<1x256xf32>
    tpu.vector_store %arg4[%c0_5, %c0_6], %4 {strides = array<i32>} : memref<1x256xf32, #tpu.memory_space<vmem>>, vector<1x256xf32>,
    return
  }
  func.func @transform_0(%arg0: i32) -> (i32, i32) {
    %c0_i32 = arith.constant 0 : i32
    %c0_i32_0 = arith.constant 0 : i32
    return %arg0, %c0_i32 : i32, i32
  }
  func.func @transform_1(%arg0: i32) -> (i32, i32) {
    %c0_i32 = arith.constant 0 : i32
    %c0_i32_0 = arith.constant 0 : i32
    %c0_i32_1 = arith.constant 0 : i32
    return %c0_i32, %c0_i32_0 : i32, i32
  }
  func.func @transform_2(%arg0: i32) -> (i32, i32) {
    %c0_i32 = arith.constant 0 : i32
    %c0_i32_0 = arith.constant 0 : i32
    %c0_i32_1 = arith.constant 0 : i32
    return %c0_i32, %c0_i32_0 : i32, i32
  }
  func.func @transform_3(%arg0: i32) -> (i32, i32) {
    %c0_i32 = arith.constant 0 : i32
    %c0_i32_0 = arith.constant 0 : i32
    return %arg0, %c0_i32 : i32, i32
  }
}

</mosaic_0001>

<llo_original>
// kernel: tpu_custom_call.1
$region0: #{tpu_custom_call.1}
  #allocation0 [shape = 'u32[]', space=smem, size = 0x4, offset = 0x4, fixed_abs, tag = 'smem constant byte address 0x4 - core index']
  #allocation1 [shape = 'u32[72,128]{1,0:T(1,128)}', space=vmem, size = 0x9000, scoped, tag = 'internal scratch']
  %s0 = inlined_call_operand.hbm [shape: f32[1,256], index: 0, kind: input, shape index: {}]
  %s1 = inlined_call_operand.hbm [shape: f32[1,256], index: 1, kind: input, shape index: {}]
  %s2 = inlined_call_operand.hbm [shape: f32[1,256], index: 2, kind: input, shape index: {}]
  %s3 = inlined_call_operand.hbm [shape: f32[1,256], index: 3, kind: output, shape index: {}]
  %s4 = sld [smem:[#allocation0]]
  $region34: #{tpu_custom_call.1} parent=0
    _
  %s6 = ssub.s32 1, %s4
  %s7 = scalar_select 0, %s6, %s4
  $region1: #{tpu_custom_call.1} parent=0
    #allocation2 [shape = 'u8[1024]{0}', space=vmem, size = 0x400, scoped, tag = 'input window, operand 0, single buffered']
    #allocation3 [shape = 's32[1]{0}', space=sflag, size = 0x4, scoped, tag = 'scoped memory for tpu_custom_call.1']
    #allocation4 [shape = 's32[1]{0}', space=sflag, size = 0x4, scoped, tag = 'scoped memory for tpu_custom_call.1']
    #allocation5 [shape = 'u8[1024]{0}', space=vmem, size = 0x400, scoped, tag = 'input window, operand 1, single buffered']
    #allocation6 [shape = 's32[1]{0}', space=sflag, size = 0x4, scoped, tag = 'scoped memory for tpu_custom_call.1']
    #allocation7 [shape = 'u8[1024]{0}', space=vmem, size = 0x400, scoped, tag = 'input window, operand 2, single buffered']
    #allocation8 [shape = 'u8[1024]{0}', space=vmem, size = 0x400, scoped, tag = 'output window, operand 0, single buffered']
    %8 = vsyncpa [#allocation3], 0
    %9 = vsyncpa [#allocation6], 0
    %10 = vsyncpa [#allocation4], 0
    // Predicated region
    $region2: #{tpu_custom_call.1} parent=1 // pred_check
      _
    $region3: #{tpu_custom_call.1} parent=1 // pred_check_branch
      %12 = sbr.rel (0) target = $region5
    $region4: #{tpu_custom_call.1} parent=1 // pred_region
      %14 = vsyncadd [#allocation3], 0
      %s16 = sshll.u32 %s0, 4
      %s17 = int_to_ptr.hbm [resolvable:$true] %s16
      %s18 = sshll.u32 [#allocation2], 4
      %s19 = int_to_ptr.vmem [resolvable:$true] %s18
      %21 = dma.hbm_to_vmem [thread:$0]  %s17, 32, %s19, [#allocation3]
    $region5: #{tpu_custom_call.1} parent=1 // pred_fallthru
      _
    // Predicated region
    $region6: #{tpu_custom_call.1} parent=1 // pred_check
      _
    $region7: #{tpu_custom_call.1} parent=1 // pred_check_branch
      %23 = sbr.rel (0) target = $region9
    $region8: #{tpu_custom_call.1} parent=1 // pred_region
      %25 = vsyncadd [#allocation6], 0
      %s27 = sshll.u32 %s1, 4
      %s28 = int_to_ptr.hbm [resolvable:$true] %s27
      %s29 = sshll.u32 [#allocation5], 4
      %s30 = int_to_ptr.vmem [resolvable:$true] %s29
      %32 = dma.hbm_to_vmem [thread:$0]  %s28, 32, %s30, [#allocation6]
    $region9: #{tpu_custom_call.1} parent=1 // pred_fallthru
      _
    // Predicated region
    $region10: #{tpu_custom_call.1} parent=1 // pred_check
      _
    $region11: #{tpu_custom_call.1} parent=1 // pred_check_branch
      %34 = sbr.rel (0) target = $region13
    $region12: #{tpu_custom_call.1} parent=1 // pred_region
      %36 = vsyncadd [#allocation6], 0
      %s38 = sshll.u32 %s2, 4
      %s39 = int_to_ptr.hbm [resolvable:$true] %s38
      %s40 = sshll.u32 [#allocation7], 4
      %s41 = int_to_ptr.vmem [resolvable:$true] %s40
      %43 = dma.hbm_to_vmem [thread:$0]  %s39, 32, %s41, [#allocation6]
    $region13: #{tpu_custom_call.1} parent=1 // pred_fallthru
      _
    // Predicated region
    $region14: #{tpu_custom_call.1} parent=1 // pred_check
      _
    $region15: #{tpu_custom_call.1} parent=1 // pred_check_branch
      %45 = sbr.rel (0) target = $region17
    $region16: #{tpu_custom_call.1} parent=1 // pred_region
      %47 = dma.done [#allocation3], 32
    $region17: #{tpu_custom_call.1} parent=1 // pred_fallthru
      _
    // Predicated region
    $region18: #{tpu_custom_call.1} parent=1 // pred_check
      _
    $region19: #{tpu_custom_call.1} parent=1 // pred_check_branch
      %49 = sbr.rel (0) target = $region21
    $region20: #{tpu_custom_call.1} parent=1 // pred_region
      %51 = dma.done [#allocation6], 32
    $region21: #{tpu_custom_call.1} parent=1 // pred_fallthru
      _
    // Predicated region
    $region22: #{tpu_custom_call.1} parent=1 // pred_check
      _
    $region23: #{tpu_custom_call.1} parent=1 // pred_check_branch
      %53 = sbr.rel (0) target = $region25
    $region24: #{tpu_custom_call.1} parent=1 // pred_region
      %55 = dma.done [#allocation6], 32
    $region25: #{tpu_custom_call.1} parent=1 // pred_fallthru
      _
    %v56 = vld [vmem:[#allocation2] sm:$0x3]
    %v57 = vld [vmem:[#allocation5] sm:$0x3]
    %v58 = vld [vmem:[#allocation7] sm:$0x3]
    %v59 = vmul.f32 %v56, %v57
    %v60 = vadd.f32 %v59, %v58
    %v61 = vlaneseq
    %vm62 = vcmp.ge.s32.totalorder %v61, 0
    %vm63 = vcmp.lt.s32.totalorder %v61, 256
    %vm64 = vmand %vm62, %vm63
    %65 = vst.msk [vmem:[#allocation8] sm:$0x3] %vm64, %v60
    // Predicated region
    $region26: #{tpu_custom_call.1} parent=1 // pred_check
      _
    $region27: #{tpu_custom_call.1} parent=1 // pred_check_branch
      %67 = sbr.rel (0) target = $region29
    $region28: #{tpu_custom_call.1} parent=1 // pred_region
      %69 = vsyncadd [#allocation4], 0
      %s71 = sshll.u32 [#allocation8], 4
      %s72 = int_to_ptr.vmem [resolvable:$true] %s71
      %s73 = sshll.u32 %s3, 4
      %s74 = int_to_ptr.hbm [resolvable:$true] %s73
      %76 = dma.vmem_to_hbm [thread:$0]  %s72, 32, %s74, [#allocation4]
    $region29: #{tpu_custom_call.1} parent=1 // pred_fallthru
      _
    // Predicated region
    $region30: #{tpu_custom_call.1} parent=1 // pred_check
      _
    $region31: #{tpu_custom_call.1} parent=1 // pred_check_branch
      %78 = sbr.rel (0) target = $region33
    $region32: #{tpu_custom_call.1} parent=1 // pred_region
      %80 = dma.done [#allocation4], 32
    $region33: #{tpu_custom_call.1} parent=1 // pred_fallthru
      _
    %81 = vsyncpa [#allocation3], 1
    %82 = vsyncpa [#allocation6], 1
    %83 = vsyncpa [#allocation4], 1

</llo_original>
